<compile_context>
chip_gen: v7x
topology: tpu7x:2x2x1
jax: 0.10.0
libtpu: 0.0.40
codegen_flags: <defaults>
</compile_context>

<pallas_src>
import functools

import numpy as np
import jax
import jax.numpy as jnp
from jax.experimental import pallas as pl
from jax.experimental.pallas import tpu as pltpu


# ---------------------------------------------------------------------------
# Kernels
# ---------------------------------------------------------------------------

def _dw_conv_kernel(x_ref, w_ref, b_ref, o_ref, *, K, s, Ho, Wo):
    """Depthwise valid conv for one batch element.

    x_ref: (1, H, W, F)    NHWC tile (channels in lanes)
    w_ref: (K, K, F)       per-channel kernel taps
    b_ref: (1, F)          bias
    o_ref: (1, Ho, Wo, F)  conv output tile
    """
    xv = x_ref[0].astype(jnp.float32)        # (H, W, F)
    wv = w_ref[...].astype(jnp.float32)      # (K, K, F)
    F = xv.shape[-1]
    acc = jnp.zeros((Ho, Wo, F), jnp.float32) + b_ref[...].astype(jnp.float32).reshape(1, 1, F)
    # K*K taps fully unrolled (K is small): each tap is a VPU multiply-add of a
    # shifted (Ho, Wo, F) window against a (1, 1, F) weight vector.
    for kh in range(K):
        for kw in range(K):
            if s == 1:
                patch = xv[kh:kh + Ho, kw:kw + Wo, :]
            else:
                patch = jax.lax.slice(
                    xv,
                    (kh, kw, 0),
                    (kh + s * (Ho - 1) + 1, kw + s * (Wo - 1) + 1, F),
                    (s, s, 1))
            acc = acc + patch * wv[kh:kh + 1, kw:kw + 1, :]
    o_ref[0] = acc.astype(o_ref.dtype)


def _squash_kernel(x_ref, o_ref, *, eps):
    """Capsule squash over the capsule-property dim for one batch row.

    x_ref / o_ref: (1, N, D)
    squash(x) = (1 - 1/(exp(||x||) + eps)) * x / (||x|| + eps), norm over D.
    """
    x = x_ref[0].astype(jnp.float32)                            # (N, D)
    norm = jnp.sqrt(jnp.sum(x * x, axis=-1, keepdims=True))     # (N, 1)
    scale = (1.0 - 1.0 / (jnp.exp(norm) + eps)) / (norm + eps)  # (N, 1)
    o_ref[0] = (scale * x).astype(o_ref.dtype)


# ---------------------------------------------------------------------------
# Forward wrapper
# ---------------------------------------------------------------------------

def primary_caps_forward(x_nchw, weight_oihw, bias, *, N, D, s=1, sq=True, eps=1e-20):
    """JAX/Pallas equivalent of effcn PrimaryCaps.forward.

    x_nchw:      (B, F, H, W)      input (PyTorch NCHW layout)
    weight_oihw: (F, 1, K, K)      depthwise conv weight (PyTorch layout)
    bias:        (F,)
    returns:     (B*, N, D) capsules (squashed if sq=True)
    """
    B, F, H, W = x_nchw.shape
    Fo, ic, K, K2 = weight_oihw.shape
    assert Fo == F and ic == 1 and K == K2, "expected depthwise weight (F, 1, K, K)"
    Ho = (H - K) // s + 1
    Wo = (W - K) // s + 1
    assert Ho >= 1 and Wo >= 1, "kernel larger than input (valid padding)"
    assert (B * F * Ho * Wo) % (N * D) == 0, "conv output incompatible with (N, D)"

    # Layout plumbing (handled by XLA, not a Pallas copy): channels -> lanes.
    x_nhwc = jnp.transpose(x_nchw, (0, 2, 3, 1))          # (B, H, W, F)
    w_kkf = jnp.transpose(weight_oihw[:, 0], (1, 2, 0))   # (K, K, F)
    b_1f = bias.reshape(1, F)

    conv = pl.pallas_call(
        functools.partial(_dw_conv_kernel, K=K, s=s, Ho=Ho, Wo=Wo),
        out_shape=jax.ShapeDtypeStruct((B, Ho, Wo, F), x_nchw.dtype),
        grid_spec=pltpu.PrefetchScalarGridSpec(
            num_scalar_prefetch=0,
            grid=(B,),
            in_specs=[
                pl.BlockSpec((1, H, W, F), lambda b: (b, 0, 0, 0)),
                pl.BlockSpec((K, K, F), lambda b: (0, 0, 0)),
                pl.BlockSpec((1, F), lambda b: (0, 0)),
            ],
            out_specs=pl.BlockSpec((1, Ho, Wo, F), lambda b: (b, 0, 0, 0)),
        ),
        compiler_params=pltpu.CompilerParams(dimension_semantics=("parallel",)),
    )(x_nhwc, w_kkf, b_1f)

    # Back to NCHW so the flatten order matches torch's `.view` on a contiguous
    # NCHW tensor; the view itself is a free metadata reshape (no copy kernel).
    conv_nchw = jnp.transpose(conv, (0, 3, 1, 2))          # (B, F, Ho, Wo)
    caps = jnp.reshape(conv_nchw, (-1, N, D))              # (B*, N, D)
    if not sq:
        return caps

    Bout = caps.shape[0]
    return pl.pallas_call(
        functools.partial(_squash_kernel, eps=eps),
        out_shape=jax.ShapeDtypeStruct((Bout, N, D), caps.dtype),
        grid_spec=pltpu.PrefetchScalarGridSpec(
            num_scalar_prefetch=0,
            grid=(Bout,),
            in_specs=[pl.BlockSpec((1, N, D), lambda b: (b, 0, 0))],
            out_specs=pl.BlockSpec((1, N, D), lambda b: (b, 0, 0)),
        ),
        compiler_params=pltpu.CompilerParams(dimension_semantics=("parallel",)),
    )(caps)


class PrimaryCaps:
    """JAX/Pallas port of effcn.layers.PrimaryCaps (depthwise conv + view + squash)."""

    def __init__(self, F, K, N, D, s=1, sq=True, *, key, dtype=jnp.float32):
        self.F, self.K, self.N, self.D, self.s, self.sq = F, K, N, D, s, sq
        kw, kb = jax.random.split(key)
        bound = 1.0 / float(np.sqrt(K * K))  # PyTorch Conv2d default fan-in bound
        self.weight = jax.random.uniform(kw, (F, 1, K, K), dtype, -bound, bound)
        self.bias = jax.random.uniform(kb, (F,), dtype, -bound, bound)

    def __call__(self, x):
        return primary_caps_forward(x, self.weight, self.bias,
                                    N=self.N, D=self.D, s=self.s, sq=self.sq)


# ---------------------------------------------------------------------------
# Reference (pure numpy, float64) and demo
# ---------------------------------------------------------------------------

def _reference(x, w_oihw, bias, N, D, s, eps=1e-20):
    xn = np.asarray(x, dtype=np.float64)
    wn = np.asarray(w_oihw, dtype=np.float64)       # (F, 1, K, K)
    bn = np.asarray(bias, dtype=np.float64)
    B, F, H, W = xn.shape
    K = wn.shape[2]
    Ho = (H - K) // s + 1
    Wo = (W - K) // s + 1
    out = np.zeros((B, F, Ho, Wo), dtype=np.float64)
    for ho in range(Ho):
        for wo in range(Wo):
            patch = xn[:, :, ho * s:ho * s + K, wo * s:wo * s + K]   # (B, F, K, K)
            out[:, :, ho, wo] = np.sum(patch * wn[None, :, 0], axis=(2, 3))
    out = out + bn[None, :, None, None]
    caps = out.reshape(-1, N, D)
    norm = np.linalg.norm(caps, axis=2, keepdims=True)
    ref = (1.0 - 1.0 / (np.exp(norm) + eps)) * (caps / (norm + eps))
    return ref.astype(np.float32)


if __name__ == "__main__":
    key = jax.random.PRNGKey(0)
    k1, k2, k3, k4 = jax.random.split(key, 4)

    # Canonical effcn usage: spatial == kernel -> 1x1 conv output, F = N * D.
    B, Fc, K, s = 2, 32, 4, 1
    N, D = 8, 4
    x = jax.random.normal(k1, (B, Fc, K, K), dtype=jnp.float32)
    mod = PrimaryCaps(F=Fc, K=K, N=N, D=D, s=s, sq=True, key=k2)
    y = jax.block_until_ready(mod(x))
    assert y.shape == (B, N, D), y.shape
    assert y.dtype == x.dtype
    np.testing.assert_allclose(np.asarray(y),
                               _reference(x, mod.weight, mod.bias, N, D, s),
                               rtol=1e-5, atol=1e-5)

    # General path: Ho, Wo > 1 exercising the NCHW channel-major flatten order.
    F2, K2, H2 = 8, 3, 8
    Ho2 = H2 - K2 + 1                       # 6
    N2, D2 = (F2 * Ho2 * Ho2) // 8, 8       # 36, 8
    x2 = jax.random.normal(k3, (B, F2, H2, H2), dtype=jnp.float32)
    mod2 = PrimaryCaps(F=F2, K=K2, N=N2, D=D2, s=1, sq=True, key=k4)
    y2 = jax.block_until_ready(mod2(x2))
    assert y2.shape == (B, N2, D2), y2.shape
    np.testing.assert_allclose(np.asarray(y2),
                               _reference(x2, mod2.weight, mod2.bias, N2, D2, 1),
                               rtol=1e-5, atol=1e-5)

    print("KERNEL_OK")
</pallas_src>

<mosaic_0001>
module attributes {stable_mosaic.version = 11 : i64} {
  func.func @_dw_conv_kernel(%arg0: i32, %arg1: memref<1x4x4x32xf32, #tpu.memory_space<vmem>>, %arg2: memref<4x4x32xf32, #tpu.memory_space<vmem>>, %arg3: memref<1x32xf32, #tpu.memory_space<vmem>>, %arg4: memref<1x1x1x32xf32, #tpu.memory_space<vmem>>) attributes {dimension_semantics = [#tpu.dimension_semantics<parallel>], iteration_bounds = array<i64: 2>, scalar_prefetch = 0 : i64, scratch_operands = 0 : i64, tpu.core_type = #tpu.core_type<tc>, window_params = [{transform_indices = @transform_0, window_bounds = array<i64: 1, 4, 4, 32>}, {pipeline_mode = #tpu.pipeline_mode<synchronous>, transform_indices = @transform_1, window_bounds = array<i64: 4, 4, 32>}, {pipeline_mode = #tpu.pipeline_mode<synchronous>, transform_indices = @transform_2, window_bounds = array<i64: 1, 32>}, {transform_indices = @transform_3, window_bounds = array<i64: 1, 1, 1, 32>}]} {
    %c0 = arith.constant 0 : index
    %c0_0 = arith.constant 0 : index
    %c0_1 = arith.constant 0 : index
    %c0_2 = arith.constant 0 : index
    %0 = vector.load %arg1[%c0, %c0_0, %c0_1, %c0_2] : memref<1x4x4x32xf32, #tpu.memory_space<vmem>>, vector<1x4x4x32xf32>
    %1 = vector.shape_cast %0 : vector<1x4x4x32xf32> to vector<4x4x32xf32>
    %c0_3 = arith.constant 0 : index
    %c0_4 = arith.constant 0 : index
    %c0_5 = arith.constant 0 : index
    %2 = vector.load %arg2[%c0_3, %c0_4, %c0_5] : memref<4x4x32xf32, #tpu.memory_space<vmem>>, vector<4x4x32xf32>
    %cst = arith.constant 0.000000e+00 : f32
    %3 = vector.broadcast %cst : f32 to vector<1x1x32xf32>
    %c0_6 = arith.constant 0 : index
    %c0_7 = arith.constant 0 : index
    %4 = vector.load %arg3[%c0_6, %c0_7] : memref<1x32xf32, #tpu.memory_space<vmem>>, vector<1x32xf32>
    %5 = vector.shape_cast %4 : vector<1x32xf32> to vector<1x1x32xf32>
    %6 = arith.addf %3, %5 : vector<1x1x32xf32>
    %7 = vector.extract_strided_slice %1 {offsets = [0, 0, 0], sizes = [1, 1, 32], strides = [1, 1, 1]} : vector<4x4x32xf32> to vector<1x1x32xf32>
    %8 = vector.extract_strided_slice %2 {offsets = [0, 0, 0], sizes = [1, 1, 32], strides = [1, 1, 1]} : vector<4x4x32xf32> to vector<1x1x32xf32>
    %9 = arith.mulf %7, %8 : vector<1x1x32xf32>
    %10 = arith.addf %6, %9 : vector<1x1x32xf32>
    %11 = vector.extract_strided_slice %1 {offsets = [0, 1, 0], sizes = [1, 1, 32], strides = [1, 1, 1]} : vector<4x4x32xf32> to vector<1x1x32xf32>
    %12 = vector.extract_strided_slice %2 {offsets = [0, 1, 0], sizes = [1, 1, 32], strides = [1, 1, 1]} : vector<4x4x32xf32> to vector<1x1x32xf32>
    %13 = arith.mulf %11, %12 : vector<1x1x32xf32>
    %14 = arith.addf %10, %13 : vector<1x1x32xf32>
    %15 = vector.extract_strided_slice %1 {offsets = [0, 2, 0], sizes = [1, 1, 32], strides = [1, 1, 1]} : vector<4x4x32xf32> to vector<1x1x32xf32>
    %16 = vector.extract_strided_slice %2 {offsets = [0, 2, 0], sizes = [1, 1, 32], strides = [1, 1, 1]} : vector<4x4x32xf32> to vector<1x1x32xf32>
    %17 = arith.mulf %15, %16 : vector<1x1x32xf32>
    %18 = arith.addf %14, %17 : vector<1x1x32xf32>
    %19 = vector.extract_strided_slice %1 {offsets = [0, 3, 0], sizes = [1, 1, 32], strides = [1, 1, 1]} : vector<4x4x32xf32> to vector<1x1x32xf32>
    %20 = vector.extract_strided_slice %2 {offsets = [0, 3, 0], sizes = [1, 1, 32], strides = [1, 1, 1]} : vector<4x4x32xf32> to vector<1x1x32xf32>
    %21 = arith.mulf %19, %20 : vector<1x1x32xf32>
    %22 = arith.addf %18, %21 : vector<1x1x32xf32>
    %23 = vector.extract_strided_slice %1 {offsets = [1, 0, 0], sizes = [1, 1, 32], strides = [1, 1, 1]} : vector<4x4x32xf32> to vector<1x1x32xf32>
    %24 = vector.extract_strided_slice %2 {offsets = [1, 0, 0], sizes = [1, 1, 32], strides = [1, 1, 1]} : vector<4x4x32xf32> to vector<1x1x32xf32>
    %25 = arith.mulf %23, %24 : vector<1x1x32xf32>
    %26 = arith.addf %22, %25 : vector<1x1x32xf32>
    %27 = vector.extract_strided_slice %1 {offsets = [1, 1, 0], sizes = [1, 1, 32], strides = [1, 1, 1]} : vector<4x4x32xf32> to vector<1x1x32xf32>
    %28 = vector.extract_strided_slice %2 {offsets = [1, 1, 0], sizes = [1, 1, 32], strides = [1, 1, 1]} : vector<4x4x32xf32> to vector<1x1x32xf32>
    %29 = arith.mulf %27, %28 : vector<1x1x32xf32>
    %30 = arith.addf %26, %29 : vector<1x1x32xf32>
    %31 = vector.extract_strided_slice %1 {offsets = [1, 2, 0], sizes = [1, 1, 32], strides = [1, 1, 1]} : vector<4x4x32xf32> to vector<1x1x32xf32>
    %32 = vector.extract_strided_slice %2 {offsets = [1, 2, 0], sizes = [1, 1, 32], strides = [1, 1, 1]} : vector<4x4x32xf32> to vector<1x1x32xf32>
    %33 = arith.mulf %31, %32 : vector<1x1x32xf32>
    %34 = arith.addf %30, %33 : vector<1x1x32xf32>
    %35 = vector.extract_strided_slice %1 {offsets = [1, 3, 0], sizes = [1, 1, 32], strides = [1, 1, 1]} : vector<4x4x32xf32> to vector<1x1x32xf32>
    %36 = vector.extract_strided_slice %2 {offsets = [1, 3, 0], sizes = [1, 1, 32], strides = [1, 1, 1]} : vector<4x4x32xf32> to vector<1x1x32xf32>
    %37 = arith.mulf %35, %36 : vector<1x1x32xf32>
    %38 = arith.addf %34, %37 : vector<1x1x32xf32>
    %39 = vector.extract_strided_slice %1 {offsets = [2, 0, 0], sizes = [1, 1, 32], strides = [1, 1, 1]} : vector<4x4x32xf32> to vector<1x1x32xf32>
    %40 = vector.extract_strided_slice %2 {offsets = [2, 0, 0], sizes = [1, 1, 32], strides = [1, 1, 1]} : vector<4x4x32xf32> to vector<1x1x32xf32>
    %41 = arith.mulf %39, %40 : vector<1x1x32xf32>
    %42 = arith.addf %38, %41 : vector<1x1x32xf32>
    %43 = vector.extract_strided_slice %1 {offsets = [2, 1, 0], sizes = [1, 1, 32], strides = [1, 1, 1]} : vector<4x4x32xf32> to vector<1x1x32xf32>
    %44 = vector.extract_strided_slice %2 {offsets = [2, 1, 0], sizes = [1, 1, 32], strides = [1, 1, 1]} : vector<4x4x32xf32> to vector<1x1x32xf32>
    %45 = arith.mulf %43, %44 : vector<1x1x32xf32>
    %46 = arith.addf %42, %45 : vector<1x1x32xf32>
    %47 = vector.extract_strided_slice %1 {offsets = [2, 2, 0], sizes = [1, 1, 32], strides = [1, 1, 1]} : vector<4x4x32xf32> to vector<1x1x32xf32>
    %48 = vector.extract_strided_slice %2 {offsets = [2, 2, 0], sizes = [1, 1, 32], strides = [1, 1, 1]} : vector<4x4x32xf32> to vector<1x1x32xf32>
    %49 = arith.mulf %47, %48 : vector<1x1x32xf32>
    %50 = arith.addf %46, %49 : vector<1x1x32xf32>
    %51 = vector.extract_strided_slice %1 {offsets = [2, 3, 0], sizes = [1, 1, 32], strides = [1, 1, 1]} : vector<4x4x32xf32> to vector<1x1x32xf32>
    %52 = vector.extract_strided_slice %2 {offsets = [2, 3, 0], sizes = [1, 1, 32], strides = [1, 1, 1]} : vector<4x4x32xf32> to vector<1x1x32xf32>
    %53 = arith.mulf %51, %52 : vector<1x1x32xf32>
    %54 = arith.addf %50, %53 : vector<1x1x32xf32>
    %55 = vector.extract_strided_slice %1 {offsets = [3, 0, 0], sizes = [1, 1, 32], strides = [1, 1, 1]} : vector<4x4x32xf32> to vector<1x1x32xf32>
    %56 = vector.extract_strided_slice %2 {offsets = [3, 0, 0], sizes = [1, 1, 32], strides = [1, 1, 1]} : vector<4x4x32xf32> to vector<1x1x32xf32>
    %57 = arith.mulf %55, %56 : vector<1x1x32xf32>
    %58 = arith.addf %54, %57 : vector<1x1x32xf32>
    %59 = vector.extract_strided_slice %1 {offsets = [3, 1, 0], sizes = [1, 1, 32], strides = [1, 1, 1]} : vector<4x4x32xf32> to vector<1x1x32xf32>
    %60 = vector.extract_strided_slice %2 {offsets = [3, 1, 0], sizes = [1, 1, 32], strides = [1, 1, 1]} : vector<4x4x32xf32> to vector<1x1x32xf32>
    %61 = arith.mulf %59, %60 : vector<1x1x32xf32>
    %62 = arith.addf %58, %61 : vector<1x1x32xf32>
    %63 = vector.extract_strided_slice %1 {offsets = [3, 2, 0], sizes = [1, 1, 32], strides = [1, 1, 1]} : vector<4x4x32xf32> to vector<1x1x32xf32>
    %64 = vector.extract_strided_slice %2 {offsets = [3, 2, 0], sizes = [1, 1, 32], strides = [1, 1, 1]} : vector<4x4x32xf32> to vector<1x1x32xf32>
    %65 = arith.mulf %63, %64 : vector<1x1x32xf32>
    %66 = arith.addf %62, %65 : vector<1x1x32xf32>
    %67 = vector.extract_strided_slice %1 {offsets = [3, 3, 0], sizes = [1, 1, 32], strides = [1, 1, 1]} : vector<4x4x32xf32> to vector<1x1x32xf32>
    %68 = vector.extract_strided_slice %2 {offsets = [3, 3, 0], sizes = [1, 1, 32], strides = [1, 1, 1]} : vector<4x4x32xf32> to vector<1x1x32xf32>
    %69 = arith.mulf %67, %68 : vector<1x1x32xf32>
    %70 = arith.addf %66, %69 : vector<1x1x32xf32>
    %c0_8 = arith.constant 0 : index
    %c0_9 = arith.constant 0 : index
    %c0_10 = arith.constant 0 : index
    %c0_11 = arith.constant 0 : index
    %71 = vector.load %arg4[%c0_8, %c0_9, %c0_10, %c0_11] : memref<1x1x1x32xf32, #tpu.memory_space<vmem>>, vector<1x1x1x32xf32>
    %72 = vector.shape_cast %71 : vector<1x1x1x32xf32> to vector<1x1x32xf32>
    %73 = vector.shape_cast %70 : vector<1x1x32xf32> to vector<1x1x1x32xf32>
    tpu.vector_store %arg4[%c0_8, %c0_9, %c0_10, %c0_11], %73 {strides = array<i32>} : memref<1x1x1x32xf32, #tpu.memory_space<vmem>>, vector<1x1x1x32xf32>,
    return
  }
  func.func @transform_0(%arg0: i32) -> (i32, i32, i32, i32) {
    %c0_i32 = arith.constant 0 : i32
    %c0_i32_0 = arith.constant 0 : i32
    %c0_i32_1 = arith.constant 0 : i32
    %c0_i32_2 = arith.constant 0 : i32
    return %arg0, %c0_i32, %c0_i32_0, %c0_i32_1 : i32, i32, i32, i32
  }
  func.func @transform_1(%arg0: i32) -> (i32, i32, i32) {
    %c0_i32 = arith.constant 0 : i32
    %c0_i32_0 = arith.constant 0 : i32
    %c0_i32_1 = arith.constant 0 : i32
    %c0_i32_2 = arith.constant 0 : i32
    return %c0_i32, %c0_i32_0, %c0_i32_1 : i32, i32, i32
  }
  func.func @transform_2(%arg0: i32) -> (i32, i32) {
    %c0_i32 = arith.constant 0 : i32
    %c0_i32_0 = arith.constant 0 : i32
    %c0_i32_1 = arith.constant 0 : i32
    return %c0_i32, %c0_i32_0 : i32, i32
  }
  func.func @transform_3(%arg0: i32) -> (i32, i32, i32, i32) {
    %c0_i32 = arith.constant 0 : i32
    %c0_i32_0 = arith.constant 0 : i32
    %c0_i32_1 = arith.constant 0 : i32
    %c0_i32_2 = arith.constant 0 : i32
    return %arg0, %c0_i32, %c0_i32_0, %c0_i32_1 : i32, i32, i32, i32
  }
}

</mosaic_0001>

<llo_original>
// kernel: tpu_custom_call.1
$region0: #{tpu_custom_call.1}
  #allocation0 [shape = 'u32[]', space=smem, size = 0x4, offset = 0x4, fixed_abs, tag = 'smem constant byte address 0x4 - core index']
  #allocation1 [shape = 'u32[144,128]{1,0:T(1,128)}', space=vmem, size = 0x12000, scoped, tag = 'internal scratch']
  %s0 = inlined_call_operand.hbm [shape: f32[2,4,4,32], index: 0, kind: input, shape index: {}]
  %s1 = inlined_call_operand.hbm [shape: f32[4,4,32], index: 1, kind: input, shape index: {}]
  %s2 = inlined_call_operand.vmem [shape: f32[1,32], index: 2, kind: input, shape index: {}]
  %s3 = inlined_call_operand.hbm [shape: f32[2,1,1,32], index: 3, kind: output, shape index: {}]
  %s4 = sld [smem:[#allocation0]]
  $region53: #{tpu_custom_call.1} parent=0
    _
  %s6 = ssub.s32 1, %s4
  %s7 = scalar_select 0, %s6, %s4
  $region1: #{tpu_custom_call.1} parent=0
    #allocation2 [shape = 'u8[16384]{0}', space=vmem, size = 0x4000, scoped, tag = 'input window, operand 0']
    #allocation3 [shape = 's32[2]{0}', space=sflag, size = 0x8, scoped, tag = 'scoped memory for tpu_custom_call.1']
    #allocation4 [shape = 's32[2]{0}', space=sflag, size = 0x8, scoped, tag = 'scoped memory for tpu_custom_call.1']
    #allocation5 [shape = 'u8[8192]{0}', space=vmem, size = 0x2000, scoped, tag = 'input window, operand 1, single buffered']
    #allocation6 [shape = 's32[1]{0}', space=sflag, size = 0x4, scoped, tag = 'scoped memory for tpu_custom_call.1']
    #allocation7 [shape = 'u8[1024]{0}', space=vmem, size = 0x400, scoped, tag = 'output window, operand 0']
    %8 = vsyncpa [#allocation3], 0
    %s9 = scalar_lea.sflag [#allocation3], 1
    %10 = vsyncpa %s9, 0
    %11 = vsyncpa [#allocation6], 0
    %12 = vsyncpa [#allocation4], 0
    %s13 = scalar_lea.sflag [#allocation4], 1
    %14 = vsyncpa %s13, 0
    loop: start=0, step=1, limit=4
    $region2: #{tpu_custom_call.1} parent=1 // loop_pre_header
      _
    $region3: #{tpu_custom_call.1} parent=1 // loop_header
      %s16 = sphi 0, %s20
      %p17 = scmp.ge.s32.totalorder %s16, 4
      %s26 = sphi 0, %s28
      %s29 = sphi 0, %s26
      %s30 = sphi 0, %s29
      %s46 = sphi 0, %s30
      %s50 = sphi 0, %s50
      %s52 = sphi 0, %s50
      %s53 = sphi 0, %s52
      %s67 = sphi 0, %s53
      %s71 = sphi 0, %s71
      %s73 = sphi 0, %s71
      %s74 = sphi 0, %s73
      %s88 = sphi 0, %s74
      %s94 = sphi 0, %s96
      %s97 = sphi 0, %s94
      %s98 = sphi 0, %s97
      %s114 = sphi 0, %s98
    $region4: #{tpu_custom_call.1} parent=1 // loop_header_branch
      %19 = sbr.rel (%p17) target = $region8
    $region5: #{tpu_custom_call.1} parent=1 // loop_body
      %s21 = ssub.s32 %s16, 1
      %s22 = ssub.s32 %s16, 2
      %s23 = sadd.s32 %s16, 1
      %s24 = ssub.s32 %s16, %s23
      %p25 = scmp.eq.s32.totalorder %s24, 0
      %s27 = sadd.s32 %s26, 1
      %s28 = scalar_select %p25, %s26, %s27
      %p31 = pneg %p25
      %p32 = scmp.eq.s32.totalorder %s16, 1
      %p33 = por %p31, %p32
      %p34 = scmp.ne.s32.totalorder %s26, %s29
      %p35 = scmp.eq.s32.totalorder %s16, 0
      %p36 = por %p34, %p35
      %p37 = scmp.ne.s32.totalorder %s26, %s29
      %p38 = scmp.eq.s32.totalorder %s21, 1
      %p39 = por %p37, %p38
      %p40 = scmp.ne.s32.totalorder %s29, %s30
      %p41 = scmp.eq.s32.totalorder %s21, 0
      %p42 = por %p40, %p41
      %p43 = scmp.ne.s32.totalorder %s29, %s30
      %p44 = scmp.eq.s32.totalorder %s22, 1
      %p45 = por %p43, %p44
      %p47 = scmp.ne.s32.totalorder %s30, %s46
      %p48 = scmp.eq.s32.totalorder %s22, 0
      %p49 = por %p47, %p48
      %s51 = sadd.s32 %s50, 1
      %p54 = scmp.eq.s32.totalorder %s16, 1
      %p55 = scmp.ne.s32.totalorder %s50, %s52
      %p56 = scmp.eq.s32.totalorder %s16, 0
      %p57 = por %p55, %p56
      %p58 = scmp.ne.s32.totalorder %s50, %s52
      %p59 = scmp.eq.s32.totalorder %s21, 1
      %p60 = por %p58, %p59
      %p61 = scmp.ne.s32.totalorder %s52, %s53
      %p62 = scmp.eq.s32.totalorder %s21, 0
      %p63 = por %p61, %p62
      %p64 = scmp.ne.s32.totalorder %s52, %s53
      %p65 = scmp.eq.s32.totalorder %s22, 1
      %p66 = por %p64, %p65
      %p68 = scmp.ne.s32.totalorder %s53, %s67
      %p69 = scmp.eq.s32.totalorder %s22, 0
      %p70 = por %p68, %p69
      %s72 = sadd.s32 %s71, 1
      %p75 = scmp.eq.s32.totalorder %s16, 1
      %p76 = scmp.ne.s32.totalorder %s71, %s73
      %p77 = scmp.eq.s32.totalorder %s16, 0
      %p78 = por %p76, %p77
      %p79 = scmp.ne.s32.totalorder %s71, %s73
      %p80 = scmp.eq.s32.totalorder %s21, 1
      %p81 = por %p79, %p80
      %p82 = scmp.ne.s32.totalorder %s73, %s74
      %p83 = scmp.eq.s32.totalorder %s21, 0
      %p84 = por %p82, %p83
      %p85 = scmp.ne.s32.totalorder %s73, %s74
      %p86 = scmp.eq.s32.totalorder %s22, 1
      %p87 = por %p85, %p86
      %p89 = scmp.ne.s32.totalorder %s74, %s88
      %p90 = scmp.eq.s32.totalorder %s22, 0
      %p91 = por %p89, %p90
      %s92 = ssub.s32 %s16, %s23
      %p93 = scmp.eq.s32.totalorder %s92, 0
      %s95 = sadd.s32 %s94, 1
      %s96 = scalar_select %p93, %s94, %s95
      %p99 = pneg %p93
      %p100 = scmp.eq.s32.totalorder %s16, 1
      %p101 = por %p99, %p100
      %p102 = scmp.ne.s32.totalorder %s94, %s97
      %p103 = scmp.eq.s32.totalorder %s16, 0
      %p104 = por %p102, %p103
      %p105 = scmp.ne.s32.totalorder %s94, %s97
      %p106 = scmp.eq.s32.totalorder %s21, 1
      %p107 = por %p105, %p106
      %p108 = scmp.ne.s32.totalorder %s97, %s98
      %p109 = scmp.eq.s32.totalorder %s21, 0
      %p110 = por %p108, %p109
      %p111 = scmp.ne.s32.totalorder %s97, %s98
      %p112 = scmp.eq.s32.totalorder %s22, 1
      %p113 = por %p111, %p112
      %p115 = scmp.ne.s32.totalorder %s98, %s114
      %p116 = scmp.eq.s32.totalorder %s22, 0
      %p117 = por %p115, %p116
      %p118 = scmp.le.s32.totalorder 1, %s16
      %p119 = scmp.lt.s32.totalorder %s16, 3
      %p120 = pnand %p118, %p119
      %p121 = pneg %p120
      // Predicated region
      $region9: #{tpu_custom_call.1} parent=5 // pred_check
        _
      $region10: #{tpu_custom_call.1} parent=5 // pred_check_branch
        %123 = sbr.rel (%p120) target = $region12
      $region11: #{tpu_custom_call.1} parent=5 // pred_region
        %s124 = ssub.s32 %s16, 1
        // Predicated region
        $region13: #{tpu_custom_call.1} parent=11 // pred_check
          %p125 = pneg %p63
        $region14: #{tpu_custom_call.1} parent=11 // pred_check_branch
          %127 = sbr.rel (%p125) target = $region16
        $region15: #{tpu_custom_call.1} parent=11 // pred_region
          %s129 = ssub.s32 256, 256
          %130 = vsyncadd [#allocation6], %s129
          %s131 = sshll.u32 [#allocation5], 4
          %s132 = int_to_ptr.vmem [resolvable:$true] %s131
          %137 = dma.hbm_to_vmem [thread:$0]  %s1, 256, %s132, [#allocation6], 64, 64, 4
        $region16: #{tpu_custom_call.1} parent=11 // pred_fallthru
          _
        // Predicated region
        $region17: #{tpu_custom_call.1} parent=11 // pred_check
          %p138 = pneg %p84
        $region18: #{tpu_custom_call.1} parent=11 // pred_check_branch
          %140 = sbr.rel (%p138) target = $region20
        $region19: #{tpu_custom_call.1} parent=11 // pred_region
          _
        $region20: #{tpu_custom_call.1} parent=11 // pred_fallthru
          _
      $region12: #{tpu_custom_call.1} parent=5 // pred_fallthru
        _
      %p141 = scmp.lt.s32.totalorder %s16, 2
      // Predicated region
      $region21: #{tpu_custom_call.1} parent=5 // pred_check
        %p142 = pneg %p141
      $region22: #{tpu_custom_call.1} parent=5 // pred_check_branch
        %144 = sbr.rel (%p142) target = $region24
      $region23: #{tpu_custom_call.1} parent=5 // pred_region
        // Predicated region
        $region25: #{tpu_custom_call.1} parent=23 // pred_check
          %p145 = pneg %p36
        $region26: #{tpu_custom_call.1} parent=23 // pred_check_branch
          %147 = sbr.rel (%p145) target = $region28
        $region27: #{tpu_custom_call.1} parent=23 // pred_region
          %s148 = sand.u32 %s26, 1
          %s149 = scalar_lea.sflag [#allocation3], %s148
          %s150 = sand.u32 %s26, 1
          %s151 = smul.addr %s150, 16
          %s152 = scalar_lea.vmem [#allocation2], %s151
          %s154 = ssub.s32 256, 256
          %155 = vsyncadd %s149, %s154
          %s156 = smul.addr %s16, 4
          %s157 = smul.addr %s156, 64
          %s158 = scalar_lea.hbm %s0, %s157
          %s159 = sshll.u32 %s152, 4
          %s160 = int_to_ptr.vmem [resolvable:$true] %s159
          %165 = dma.hbm_to_vmem [thread:$0]  %s158, 256, %s160, %s149, 64, 64, 4
        $region28: #{tpu_custom_call.1} parent=23 // pred_fallthru
          _
      $region24: #{tpu_custom_call.1} parent=5 // pred_fallthru
        _
      %p166 = scmp.le.s32.totalorder 1, %s16
      %p167 = scmp.lt.s32.totalorder %s16, 3
      %p168 = pnand %p166, %p167
      %p169 = pneg %p168
      // Predicated region
      $region29: #{tpu_custom_call.1} parent=5 // pred_check
        _
      $region30: #{tpu_custom_call.1} parent=5 // pred_check_branch
        %171 = sbr.rel (%p168) target = $region32
      $region31: #{tpu_custom_call.1} parent=5 // pred_region
        %s172 = ssub.s32 %s16, 1
        %s173 = sand.u32 %s29, 1
        %s174 = scalar_lea.sflag [#allocation3], %s173
        %s175 = sand.u32 %s29, 1
        %s176 = smul.addr %s175, 16
        %s177 = scalar_lea.vmem [#allocation2], %s176
        // Predicated region
        $region33: #{tpu_custom_call.1} parent=31 // pred_check
          %p178 = pneg %p42
        $region34: #{tpu_custom_call.1} parent=31 // pred_check_branch
          %180 = sbr.rel (%p178) target = $region36
        $region35: #{tpu_custom_call.1} parent=31 // pred_region
          %181 = dma.done %s174, 256
        $region36: #{tpu_custom_call.1} parent=31 // pred_fallthru
          _
        // Predicated region
        $region37: #{tpu_custom_call.1} parent=31 // pred_check
          %p182 = pneg %p63
        $region38: #{tpu_custom_call.1} parent=31 // pred_check_branch
          %184 = sbr.rel (%p182) target = $region40
        $region39: #{tpu_custom_call.1} parent=31 // pred_region
          %185 = dma.done [#allocation6], 256
        $region40: #{tpu_custom_call.1} parent=31 // pred_fallthru
          _
        %s186 = sand.u32 %s29, 1
        %s187 = scalar_lea.sflag [#allocation3], %s186
        %s188 = sand.u32 %s29, 1
        %s189 = smul.addr %s188, 16
        %s190 = scalar_lea.vmem [#allocation2], %s189
        %p191 = pneg %p42
        %p192 = pneg %p39
        %p193 = pneg %p63
        %p194 = pneg %p60
        %p195 = pneg %p84
        %p196 = pneg %p81
        %p197 = pneg %p110
        %p198 = pneg %p107
        %s199 = sand.u32 %s97, 1
        %s200 = scalar_lea.sflag [#allocation4], %s199
        %s201 = sand.u32 %s97, 1
        %s202 = scalar_lea.vmem [#allocation7], %s201
        %v203 = vld [vmem:[%s177] sm:$0xf]
        %v204 = vld [vmem:[%s177 + $0x4] sm:$0xf]
        %v205 = vld [vmem:[%s177 + $0x8] sm:$0xf]
        %v206 = vld [vmem:[%s177 + $0xc] sm:$0xf]
        %v207 = vld [vmem:[#allocation5] sm:$0xf]
        %v208 = vld [vmem:[#allocation5 + $0x4] sm:$0xf]
        %v209 = vld [vmem:[#allocation5 + $0x8] sm:$0xf]
        %v210 = vld [vmem:[#allocation5 + $0xc] sm:$0xf]
        %v211 = vld [vmem:[%s2] sm:$0x1]
        %v212 = vadd.f32 %v211, 0.0
        %v213 = vmul.f32 %v203, %v207
        %v214 = vadd.f32 %v212, %v213
        %v217 = vunpack.c.l.s4 1966171168
        %v218 = vunpack.c.0.s8 %v217
        %v219 = vlaneseq
        %v220 = vshrl.u32 %v219, 7
        %v221 = vsub.s32 %v218, %v220
        %v222 = vrot.slane %v213, %v221
        %v223 = vcombine.high %v222, %v222
        %v225 = vunpack.c.l.s4 1966171168
        %v226 = vunpack.c.0.s8 %v225
        %v227 = vlaneseq
        %v228 = vshrl.u32 %v227, 7
        %v229 = vsub.s32 %v226, %v228
        %v230 = vrot.slane %v222, %v229
        %v232 = vunpack.c.l.s4 1966171168
        %v233 = vunpack.c.0.s8 %v232
        %v234 = vlaneseq
        %v235 = vshrl.u32 %v234, 7
        %v236 = vsub.s32 %v233, %v235
        %v237 = vrot.slane %v223, %v236
        %v239 = vadd.f32 %v214, %v237
        %v240 = vcombine.high %v230, %v230
        %v242 = vadd.f32 %v239, %v240
        %v243 = vcombine.high %v237, %v237
        %v245 = vadd.f32 %v242, %v243
        %v246 = vmul.f32 %v204, %v208
        %v247 = vadd.f32 %v245, %v246
        %v250 = vunpack.c.l.s4 1966171168
        %v251 = vunpack.c.0.s8 %v250
        %v252 = vlaneseq
        %v253 = vshrl.u32 %v252, 7
        %v254 = vsub.s32 %v251, %v253
        %v255 = vrot.slane %v246, %v254
        %v256 = vcombine.high %v255, %v255
        %v258 = vunpack.c.l.s4 1966171168
        %v259 = vunpack.c.0.s8 %v258
        %v260 = vlaneseq
        %v261 = vshrl.u32 %v260, 7
        %v262 = vsub.s32 %v259, %v261
        %v263 = vrot.slane %v255, %v262
        %v265 = vunpack.c.l.s4 1966171168
        %v266 = vunpack.c.0.s8 %v265
        %v267 = vlaneseq
        %v268 = vshrl.u32 %v267, 7
        %v269 = vsub.s32 %v266, %v268
        %v270 = vrot.slane %v256, %v269
        %v272 = vadd.f32 %v247, %v270
        %v273 = vcombine.high %v263, %v263
        %v275 = vadd.f32 %v272, %v273
        %v276 = vcombine.high %v270, %v270
        %v278 = vadd.f32 %v275, %v276
        %v279 = vmul.f32 %v205, %v209
        %v280 = vadd.f32 %v278, %v279
        %v283 = vunpack.c.l.s4 1966171168
        %v284 = vunpack.c.0.s8 %v283
        %v285 = vlaneseq
        %v286 = vshrl.u32 %v285, 7
        %v287 = vsub.s32 %v284, %v286
        %v288 = vrot.slane %v279, %v287
        %v289 = vcombine.high %v288, %v288
        %v291 = vunpack.c.l.s4 1966171168
        %v292 = vunpack.c.0.s8 %v291
        %v293 = vlaneseq
        %v294 = vshrl.u32 %v293, 7
        %v295 = vsub.s32 %v292, %v294
        %v296 = vrot.slane %v288, %v295
        %v298 = vunpack.c.l.s4 1966171168
        %v299 = vunpack.c.0.s8 %v298
        %v300 = vlaneseq
        %v301 = vshrl.u32 %v300, 7
        %v302 = vsub.s32 %v299, %v301
        %v303 = vrot.slane %v289, %v302
        %v305 = vadd.f32 %v280, %v303
        %v306 = vcombine.high %v296, %v296
        %v308 = vadd.f32 %v305, %v306
        %v309 = vcombine.high %v303, %v303
        %v311 = vadd.f32 %v308, %v309
        %v312 = vmul.f32 %v206, %v210
        %v313 = vadd.f32 %v311, %v312
        %v316 = vunpack.c.l.s4 1966171168
        %v317 = vunpack.c.0.s8 %v316
        %v318 = vlaneseq
        %v319 = vshrl.u32 %v318, 7
        %v320 = vsub.s32 %v317, %v319
        %v321 = vrot.slane %v312, %v320
        %v322 = vcombine.high %v321, %v321
        %v324 = vunpack.c.l.s4 1966171168
        %v325 = vunpack.c.0.s8 %v324
        %v326 = vlaneseq
        %v327 = vshrl.u32 %v326, 7
        %v328 = vsub.s32 %v325, %v327
        %v329 = vrot.slane %v321, %v328
        %v331 = vunpack.c.l.s4 1966171168
        %v332 = vunpack.c.0.s8 %v331
        %v333 = vlaneseq
        %v334 = vshrl.u32 %v333, 7
        %v335 = vsub.s32 %v332, %v334
        %v336 = vrot.slane %v322, %v335
        %v338 = vadd.f32 %v313, %v336
        %v339 = vcombine.high %v329, %v329
        %v341 = vadd.f32 %v338, %v339
        %v342 = vcombine.high %v336, %v336
        %v344 = vadd.f32 %v341, %v342
        %vm345 = vcmask 253952
        %346 = vst.msk [vmem:[%s202] sm:$0x1] %vm345, %v344
        %s347 = sand.u32 %s97, 1
        %s348 = scalar_lea.sflag [#allocation4], %s347
        %s349 = sand.u32 %s97, 1
        %s350 = scalar_lea.vmem [#allocation7], %s349
        // Predicated region
        $region41: #{tpu_custom_call.1} parent=31 // pred_check
          %p351 = pneg %p107
        $region42: #{tpu_custom_call.1} parent=31 // pred_check_branch
          %353 = sbr.rel (%p351) target = $region44
        $region43: #{tpu_custom_call.1} parent=31 // pred_region
          %s355 = ssub.s32 16, 16
          %356 = vsyncadd %s348, %s355
          %s357 = smul.addr %s21, 16
          %s358 = scalar_lea.hbm %s3, %s357
          %s360 = sshll.u32 %s350, 4
          %s361 = int_to_ptr.vmem [resolvable:$true] %s360
          %363 = dma.vmem_to_hbm [thread:$0]  %s361, 16, %s358, %s348
        $region44: #{tpu_custom_call.1} parent=31 // pred_fallthru
          _
      $region32: #{tpu_custom_call.1} parent=5 // pred_fallthru
        _
      %p364 = scmp.le.s32.totalorder 2, %s16
      // Predicated region
      $region45: #{tpu_custom_call.1} parent=5 // pred_check
        %p365 = pneg %p364
      $region46: #{tpu_custom_call.1} parent=5 // pred_check_branch
        %367 = sbr.rel (%p365) target = $region48
      $region47: #{tpu_custom_call.1} parent=5 // pred_region
        %s368 = ssub.s32 %s16, 2
        // Predicated region
        $region49: #{tpu_custom_call.1} parent=47 // pred_check
          %p369 = pneg %p113
        $region50: #{tpu_custom_call.1} parent=47 // pred_check_branch
          %371 = sbr.rel (%p369) target = $region52
        $region51: #{tpu_custom_call.1} parent=47 // pred_region
          %s372 = sand.u32 %s98, 1
          %s373 = scalar_lea.sflag [#allocation4], %s372
          %s374 = sand.u32 %s98, 1
          %s375 = scalar_lea.vmem [#allocation7], %s374
          %376 = dma.done %s373, 16
        $region52: #{tpu_custom_call.1} parent=47 // pred_fallthru
          _
      $region48: #{tpu_custom_call.1} parent=5 // pred_fallthru
        _
    $region6: #{tpu_custom_call.1} parent=1 // loop_footer
      %s20 = sadd.s32 1, %s16
    $region7: #{tpu_custom_call.1} parent=1 // loop_footer_branch
      %15 = sbr.rel target = $region3
    $region8: #{tpu_custom_call.1} parent=1 // loop_exit
      _
    %377 = vsyncpa [#allocation3], 1
    %s378 = scalar_lea.sflag [#allocation3], 1
    %379 = vsyncpa %s378, 1
    %380 = vsyncpa [#allocation6], 1
    %381 = vsyncpa [#allocation4], 1
    %s382 = scalar_lea.sflag [#allocation4], 1
    %383 = vsyncpa %s382, 1

</llo_original>
